<compile_context>
chip_gen: v7x
topology: tpu7x:2x2x1
jax: 0.10.0
libtpu: 0.0.40
codegen_flags: <defaults>
</compile_context>

<pallas_src>
import math
import functools

import jax
import jax.numpy as jnp
from jax.experimental import pallas as pl
from jax.experimental.pallas import tpu as pltpu

_LANE = 128
_SUBLANE = 8


def _round_up(n, m):
    return ((n + m - 1) // m) * m


def _pick_tile(total, target, mult):
    """Largest multiple of `mult` that divides `total` and is <= target."""
    if total <= target:
        return total
    for t in range(target, mult - 1, -mult):
        if total % t == 0:
            return t
    return mult  # `total` is always a multiple of `mult`


# ----------------------------------------------------------------------------
# Kernel: o = abs(x @ w + b), K-tiled with an f32 accumulator in VMEM scratch.
# Grid = (M tiles [parallel], K tiles [arbitrary]).
# ----------------------------------------------------------------------------
def _fused_linear_abs_kernel(x_ref, w_ref, b_ref, o_ref, acc_ref):
    k = pl.program_id(1)

    @pl.when(k == 0)
    def _():
        acc_ref[...] = jnp.zeros_like(acc_ref)

    acc_ref[...] += jnp.dot(x_ref[...], w_ref[...],
                            preferred_element_type=jnp.float32)

    @pl.when(k == pl.num_programs(1) - 1)
    def _():
        o_ref[...] = jnp.abs(acc_ref[...] + b_ref[...]).astype(o_ref.dtype)


# ----------------------------------------------------------------------------
# Parameter handling
# ----------------------------------------------------------------------------
def init_params(key, input_size, h1=1024, h2=29, h3=1):
    """Deterministic PyTorch-Linear-like init: (w1,b1,w2,b2,w3,b3), weights [in,out]."""
    ks = jax.random.split(key, 6)

    def linear(kw, kb, fan_in, fan_out):
        bound = 1.0 / math.sqrt(fan_in)
        w = jax.random.uniform(kw, (fan_in, fan_out), jnp.float32, -bound, bound)
        b = jax.random.uniform(kb, (fan_out,), jnp.float32, -bound, bound)
        return w, b

    w1, b1 = linear(ks[0], ks[1], input_size, h1)
    w2, b2 = linear(ks[2], ks[3], h1, h2)
    w3, b3 = linear(ks[4], ks[5], h2, h3)
    return (w1, b1, w2, b2, w3, b3)


def fold_params(params):
    """One-time prep: collapse fc1/fc2/fc3 into a single [F,1] linear, then
    zero-pad to a lane-dense [Fp, 128] weight and [1, 128] bias (exact)."""
    w1, b1, w2, b2, w3, b3 = params
    w = (w1 @ w2) @ w3                       # [F, 1]
    b = (b1 @ w2 + b2) @ w3 + b3             # [1]
    F = w.shape[0]
    Fp = _round_up(F, _LANE)
    Np = _LANE                               # pad out-dim 1 -> 128 (lane-dense store)
    w_pad = jnp.zeros((Fp, Np), jnp.float32).at[:F, :1].set(w.astype(jnp.float32))
    b_pad = jnp.zeros((1, Np), jnp.float32).at[:, :1].set(
        b.reshape(1, 1).astype(jnp.float32))
    return w_pad, b_pad


# ----------------------------------------------------------------------------
# Forward
# ----------------------------------------------------------------------------
@functools.partial(jax.jit, static_argnames=("tm", "tk"))
def arch5_forward(x, w_pad, b_pad, *, tm=256, tk=512):
    """x: [B, ...] (flattened row-major, like x.view(-1, F)); returns [B, 1]."""
    B = x.shape[0]
    F = math.prod(x.shape[1:])
    Fp, Np = w_pad.shape
    assert Fp == _round_up(F, _LANE), (Fp, F)

    Bp = max(_round_up(B, _SUBLANE), _SUBLANE)
    xf = x.reshape(B, F).astype(jnp.float32)
    xf = jnp.pad(xf, ((0, Bp - B), (0, Fp - F)))

    TM = _pick_tile(Bp, tm, _SUBLANE)   # batch tile (parallel -> both TCs on v7x)
    TK = _pick_tile(Fp, tk, _LANE)      # reduction tile (keeps VMEM bounded)
    grid = (Bp // TM, Fp // TK)

    out_p = pl.pallas_call(
        _fused_linear_abs_kernel,
        out_shape=jax.ShapeDtypeStruct((Bp, Np), jnp.float32),
        grid_spec=pltpu.PrefetchScalarGridSpec(
            num_scalar_prefetch=0,
            grid=grid,
            in_specs=[
                pl.BlockSpec((TM, TK), lambda i, k: (i, k)),   # x
                pl.BlockSpec((TK, Np), lambda i, k: (k, 0)),   # folded weight
                pl.BlockSpec((1, Np), lambda i, k: (0, 0)),    # folded bias
            ],
            out_specs=pl.BlockSpec((TM, Np), lambda i, k: (i, 0)),
            scratch_shapes=[pltpu.VMEM((TM, Np), jnp.float32)],
        ),
        compiler_params=pltpu.CompilerParams(
            dimension_semantics=("parallel", "arbitrary"),
        ),
    )(xf, w_pad, b_pad)

    return out_p[:B, :1]


# ----------------------------------------------------------------------------
# Pure-JAX reference (unfolded, f32) for correctness checks.
# ----------------------------------------------------------------------------
def _reference(x, params):
    w1, b1, w2, b2, w3, b3 = params
    xf = x.reshape(x.shape[0], -1).astype(jnp.float32)
    h = xf @ w1 + b1
    h = h @ w2 + b2
    h = h @ w3 + b3
    return jnp.abs(h)


if __name__ == "__main__":
    key = jax.random.PRNGKey(0)

    # --- Test 1: small shapes consistent with the module: B=2, 1x16x16 -> F=256 ---
    k_x, k_p, key = jax.random.split(key, 3)
    B, C, H, W = 2, 1, 16, 16
    x = jax.random.normal(k_x, (B, C, H, W), jnp.float32)
    params = init_params(k_p, C * H * W)
    w_pad, b_pad = fold_params(params)           # one-time prep, out of hot path

    out = jax.block_until_ready(arch5_forward(x, w_pad, b_pad))
    ref = _reference(x, params)
    assert out.shape == (B, 1), out.shape
    assert jnp.allclose(out, ref, atol=5e-4, rtol=1e-3), (out, ref)

    # --- Test 2: exercises the M/K-tiled grid path (B=300, F=768) ---
    k_x2, k_p2 = jax.random.split(key)
    B2, C2, H2, W2 = 300, 3, 16, 16
    x2 = jax.random.normal(k_x2, (B2, C2, H2, W2), jnp.float32)
    params2 = init_params(k_p2, C2 * H2 * W2)
    w_pad2, b_pad2 = fold_params(params2)

    out2 = jax.block_until_ready(arch5_forward(x2, w_pad2, b_pad2))
    ref2 = _reference(x2, params2)
    assert out2.shape == (B2, 1), out2.shape
    assert jnp.allclose(out2, ref2, atol=5e-4, rtol=1e-3)

    print("KERNEL_OK")
</pallas_src>

<mosaic_0001>
module attributes {stable_mosaic.version = 11 : i64} {
  func.func @_fused_linear_abs_kernel(%arg0: i32, %arg1: i32, %arg2: memref<8x256xf32, #tpu.memory_space<vmem>>, %arg3: memref<256x128xf32, #tpu.memory_space<vmem>>, %arg4: memref<1x128xf32, #tpu.memory_space<vmem>>, %arg5: memref<8x128xf32, #tpu.memory_space<vmem>>, %arg6: memref<8x128xf32, #tpu.memory_space<vmem>>) attributes {dimension_semantics = [#tpu.dimension_semantics<parallel>, #tpu.dimension_semantics<arbitrary>], iteration_bounds = array<i64: 1, 1>, scalar_prefetch = 0 : i64, scratch_operands = 1 : i64, tpu.core_type = #tpu.core_type<tc>, window_params = [{transform_indices = @transform_0, window_bounds = array<i64: 8, 256>}, {transform_indices = @transform_1, window_bounds = array<i64: 256, 128>}, {pipeline_mode = #tpu.pipeline_mode<synchronous>, transform_indices = @transform_2, window_bounds = array<i64: 1, 128>}, {transform_indices = @transform_3, window_bounds = array<i64: 8, 128>}]} {
    %c0_i32 = arith.constant 0 : i32
    %0 = arith.cmpi eq, %arg1, %c0_i32 : i32
    %1 = arith.extui %0 : i1 to i32
    %c0_i32_0 = arith.constant 0 : i32
    %2 = arith.cmpi ne, %1, %c0_i32_0 : i32
    scf.if %2 {
      %cst_10 = arith.constant 0.000000e+00 : f32
      %12 = vector.broadcast %cst_10 : f32 to vector<8x128xf32>
      %c0_11 = arith.constant 0 : index
      %c0_12 = arith.constant 0 : index
      %13 = vector.load %arg6[%c0_11, %c0_12] : memref<8x128xf32, #tpu.memory_space<vmem>>, vector<8x128xf32>
      tpu.vector_store %arg6[%c0_11, %c0_12], %12 {strides = array<i32>} : memref<8x128xf32, #tpu.memory_space<vmem>>, vector<8x128xf32>,
    } else {
    }
    %c0 = arith.constant 0 : index
    %c0_1 = arith.constant 0 : index
    %3 = vector.load %arg6[%c0, %c0_1] : memref<8x128xf32, #tpu.memory_space<vmem>>, vector<8x128xf32>
    %c0_2 = arith.constant 0 : index
    %c0_3 = arith.constant 0 : index
    %4 = vector.load %arg2[%c0_2, %c0_3] : memref<8x256xf32, #tpu.memory_space<vmem>>, vector<8x256xf32>
    %c0_4 = arith.constant 0 : index
    %c0_5 = arith.constant 0 : index
    %5 = vector.load %arg3[%c0_4, %c0_5] : memref<256x128xf32, #tpu.memory_space<vmem>>, vector<256x128xf32>
    %cst = arith.constant dense<0.000000e+00> : vector<8x128xf32>
    %6 = tpu.matmul %4, %5, %cst {dimension_numbers = #tpu.dot_dimension_numbers<[1], [0], [0], [1], [0, 0, 1, 1], [], []>} : vector<8x256xf32>, vector<256x128xf32>, vector<8x128xf32> -> vector<8x128xf32>
    %7 = arith.addf %3, %6 : vector<8x128xf32>
    %c0_6 = arith.constant 0 : index
    %c0_7 = arith.constant 0 : index
    %8 = vector.load %arg6[%c0_6, %c0_7] : memref<8x128xf32, #tpu.memory_space<vmem>>, vector<8x128xf32>
    tpu.vector_store %arg6[%c0_6, %c0_7], %7 {strides = array<i32>} : memref<8x128xf32, #tpu.memory_space<vmem>>, vector<8x128xf32>,
    %c0_i32_8 = arith.constant 0 : i32
    %9 = arith.cmpi eq, %arg1, %c0_i32_8 : i32
    %10 = arith.extui %9 : i1 to i32
    %c0_i32_9 = arith.constant 0 : i32
    %11 = arith.cmpi ne, %10, %c0_i32_9 : i32
    scf.if %11 {
      %c0_10 = arith.constant 0 : index
      %c0_11 = arith.constant 0 : index
      %12 = vector.load %arg6[%c0_10, %c0_11] : memref<8x128xf32, #tpu.memory_space<vmem>>, vector<8x128xf32>
      %c0_12 = arith.constant 0 : index
      %c0_13 = arith.constant 0 : index
      %13 = vector.load %arg4[%c0_12, %c0_13] : memref<1x128xf32, #tpu.memory_space<vmem>>, vector<1x128xf32>
      %14 = vector.broadcast %13 : vector<1x128xf32> to vector<8x128xf32>
      %15 = arith.addf %12, %14 : vector<8x128xf32>
      %16 = math.absf %15 : vector<8x128xf32>
      %c0_14 = arith.constant 0 : index
      %c0_15 = arith.constant 0 : index
      %17 = vector.load %arg5[%c0_14, %c0_15] : memref<8x128xf32, #tpu.memory_space<vmem>>, vector<8x128xf32>
      tpu.vector_store %arg5[%c0_14, %c0_15], %16 {strides = array<i32>} : memref<8x128xf32, #tpu.memory_space<vmem>>, vector<8x128xf32>,
    } else {
    }
    return
  }
  func.func @transform_0(%arg0: i32, %arg1: i32) -> (i32, i32) {
    %c0_i32 = arith.constant 0 : i32
    return %arg0, %arg1 : i32, i32
  }
  func.func @transform_1(%arg0: i32, %arg1: i32) -> (i32, i32) {
    %c0_i32 = arith.constant 0 : i32
    %c0_i32_0 = arith.constant 0 : i32
    return %arg1, %c0_i32 : i32, i32
  }
  func.func @transform_2(%arg0: i32, %arg1: i32) -> (i32, i32) {
    %c0_i32 = arith.constant 0 : i32
    %c0_i32_0 = arith.constant 0 : i32
    %c0_i32_1 = arith.constant 0 : i32
    return %c0_i32, %c0_i32_0 : i32, i32
  }
  func.func @transform_3(%arg0: i32, %arg1: i32) -> (i32, i32) {
    %c0_i32 = arith.constant 0 : i32
    %c0_i32_0 = arith.constant 0 : i32
    return %arg0, %c0_i32 : i32, i32
  }
}

</mosaic_0001>

<llo_original>
// kernel: arch5_forward.1
$region0: #{arch5_forward.1}
  #allocation0 [shape = 'u32[]', space=smem, size = 0x4, offset = 0x4, fixed_abs, tag = 'smem constant byte address 0x4 - core index']
  #allocation1 [shape = 'u32[144,128]{1,0:T(1,128)}', space=vmem, size = 0x12000, scoped, tag = 'internal scratch']
  #allocation2 [shape = 'f32[8,128]{1,0:T(8,128)}', space=vmem, size = 0x1000, scoped, tag = 'scratch operand']
  %s0 = inlined_call_operand.vmem [shape: f32[8,256], index: 0, kind: input, shape index: {}]
  %s1 = inlined_call_operand.hbm [shape: f32[256,128], index: 1, kind: input, shape index: {}]
  %s2 = inlined_call_operand.vmem [shape: f32[1,128], index: 2, kind: input, shape index: {}]
  %s3 = inlined_call_operand.vmem [shape: f32[8,128], index: 3, kind: output, shape index: {}]
  %s4 = sld [smem:[#allocation0]]
  $region34: #{arch5_forward.1} parent=0
    _
  %s6 = ssub.s32 1, %s4
  %s7 = scalar_select 0, %s6, %s4
  $region1: #{arch5_forward.1} parent=0
    #allocation3 [shape = 'u8[131072]{0}', space=vmem, size = 0x20000, scoped, tag = 'input window, operand 1, single buffered']
    #allocation4 [shape = 's32[1]{0}', space=sflag, size = 0x4, scoped, tag = 'scoped memory for arch5_forward.1']
    %8 = vsyncpa [#allocation4], 0
    // Predicated region
    $region2: #{arch5_forward.1} parent=1 // pred_check
      _
    $region3: #{arch5_forward.1} parent=1 // pred_check_branch
      %10 = sbr.rel (0) target = $region5
    $region4: #{arch5_forward.1} parent=1 // pred_region
      _
    $region5: #{arch5_forward.1} parent=1 // pred_fallthru
      _
    // Predicated region
    $region6: #{arch5_forward.1} parent=1 // pred_check
      _
    $region7: #{arch5_forward.1} parent=1 // pred_check_branch
      %12 = sbr.rel (0) target = $region9
    $region8: #{arch5_forward.1} parent=1 // pred_region
      %s14 = ssub.s32 4096, 4096
      %15 = vsyncadd [#allocation4], %s14
      %s16 = sshll.u32 [#allocation3], 4
      %s17 = int_to_ptr.vmem [resolvable:$true] %s16
      %22 = dma.hbm_to_vmem [thread:$0]  %s1, 4096, %s17, [#allocation4], 128, 128, 8
    $region9: #{arch5_forward.1} parent=1 // pred_fallthru
      _
    // Predicated region
    $region10: #{arch5_forward.1} parent=1 // pred_check
      _
    $region11: #{arch5_forward.1} parent=1 // pred_check_branch
      %24 = sbr.rel (0) target = $region13
    $region12: #{arch5_forward.1} parent=1 // pred_region
      _
    $region13: #{arch5_forward.1} parent=1 // pred_fallthru
      _
    // Predicated region
    $region14: #{arch5_forward.1} parent=1 // pred_check
      _
    $region15: #{arch5_forward.1} parent=1 // pred_check_branch
      %26 = sbr.rel (0) target = $region17
    $region16: #{arch5_forward.1} parent=1 // pred_region
      %27 = dma.done [#allocation4], 4096
    $region17: #{arch5_forward.1} parent=1 // pred_fallthru
      _
    %p28 = scmp.eq.s32.totalorder 0, 0
    // Predicated region
    $region18: #{arch5_forward.1} parent=1 // pred_check
      %p29 = pneg %p28
    $region19: #{arch5_forward.1} parent=1 // pred_check_branch
      %31 = sbr.rel (%p29) target = $region21
    $region20: #{arch5_forward.1} parent=1 // pred_region
      %32 = vst [vmem:[#allocation2] sm:$0xff] 0.0
    $region21: #{arch5_forward.1} parent=1 // pred_fallthru
      _
    %v33 = vld [vmem:[#allocation2] sm:$0xff]
    %v34 = vld [vmem:[%s0] sm:$0xff]
    %v35 = vld [vmem:[%s0 + $0x8] sm:$0xff]
    %v36 = vld [vmem:[#allocation3] sm:$0xff]
    %v37 = vld [vmem:[#allocation3 + $0x8] sm:$0xff]
    %v38 = vld [vmem:[#allocation3 + $0x10] sm:$0xff]
    %v39 = vld [vmem:[#allocation3 + $0x18] sm:$0xff]
    %v40 = vld [vmem:[#allocation3 + $0x20] sm:$0xff]
    %v41 = vld [vmem:[#allocation3 + $0x28] sm:$0xff]
    %v42 = vld [vmem:[#allocation3 + $0x30] sm:$0xff]
    %v43 = vld [vmem:[#allocation3 + $0x38] sm:$0xff]
    %v44 = vld [vmem:[#allocation3 + $0x40] sm:$0xff]
    %v45 = vld [vmem:[#allocation3 + $0x48] sm:$0xff]
    %v46 = vld [vmem:[#allocation3 + $0x50] sm:$0xff]
    %v47 = vld [vmem:[#allocation3 + $0x58] sm:$0xff]
    %v48 = vld [vmem:[#allocation3 + $0x60] sm:$0xff]
    %v49 = vld [vmem:[#allocation3 + $0x68] sm:$0xff]
    %v50 = vld [vmem:[#allocation3 + $0x70] sm:$0xff]
    %v51 = vld [vmem:[#allocation3 + $0x78] sm:$0xff]
    %v52 = vld [vmem:[#allocation3 + $0x80] sm:$0xff]
    %v53 = vld [vmem:[#allocation3 + $0x88] sm:$0xff]
    %v54 = vld [vmem:[#allocation3 + $0x90] sm:$0xff]
    %v55 = vld [vmem:[#allocation3 + $0x98] sm:$0xff]
    %v56 = vld [vmem:[#allocation3 + $0xa0] sm:$0xff]
    %v57 = vld [vmem:[#allocation3 + $0xa8] sm:$0xff]
    %v58 = vld [vmem:[#allocation3 + $0xb0] sm:$0xff]
    %v59 = vld [vmem:[#allocation3 + $0xb8] sm:$0xff]
    %v60 = vld [vmem:[#allocation3 + $0xc0] sm:$0xff]
    %v61 = vld [vmem:[#allocation3 + $0xc8] sm:$0xff]
    %v62 = vld [vmem:[#allocation3 + $0xd0] sm:$0xff]
    %v63 = vld [vmem:[#allocation3 + $0xd8] sm:$0xff]
    %v64 = vld [vmem:[#allocation3 + $0xe0] sm:$0xff]
    %v65 = vld [vmem:[#allocation3 + $0xe8] sm:$0xff]
    %v66 = vld [vmem:[#allocation3 + $0xf0] sm:$0xff]
    %v67 = vld [vmem:[#allocation3 + $0xf8] sm:$0xff]
    %68 = vmatprep.subr.mxu0 0.0
    %69 = vmatpush1.msra.mxu0 %v36
    %70 = vmatprep.subr.mxu0 0.0
    %71 = vmatpush1.msra.mxu0 %v37
    %72 = vmatprep.subr.mxu0 0.0
    %73 = vmatpush1.msra.mxu0 %v38
    %74 = vmatprep.subr.mxu0 0.0
    %75 = vmatpush1.msra.mxu0 %v39
    %76 = vmatprep.subr.mxu0 0.0
    %77 = vmatpush1.msra.mxu0 %v40
    %78 = vmatprep.subr.mxu0 0.0
    %79 = vmatpush1.msra.mxu0 %v41
    %80 = vmatprep.subr.mxu0 0.0
    %81 = vmatpush1.msra.mxu0 %v42
    %82 = vmatprep.subr.mxu0 0.0
    %83 = vmatpush1.msra.mxu0 %v43
    %84 = vmatprep.subr.mxu0 0.0
    %85 = vmatpush1.msra.mxu0 %v44
    %86 = vmatprep.subr.mxu0 0.0
    %87 = vmatpush1.msra.mxu0 %v45
    %88 = vmatprep.subr.mxu0 0.0
    %89 = vmatpush1.msra.mxu0 %v46
    %90 = vmatprep.subr.mxu0 0.0
    %91 = vmatpush1.msra.mxu0 %v47
    %92 = vmatprep.subr.mxu0 0.0
    %93 = vmatpush1.msra.mxu0 %v48
    %94 = vmatprep.subr.mxu0 0.0
    %95 = vmatpush1.msra.mxu0 %v49
    %96 = vmatprep.subr.mxu0 0.0
    %97 = vmatpush1.msra.mxu0 %v50
    %98 = vmatprep.subr.mxu0 0.0
    %99 = vmatpush1.msra.mxu0 %v51
    %100 = vmatprep.subr.mxu0 0.0
    %101 = vmatpush1.msra.mxu0 %v52
    %102 = vmatprep.subr.mxu0 0.0
    %103 = vmatpush1.msra.mxu0 %v53
    %104 = vmatprep.subr.mxu0 0.0
    %105 = vmatpush1.msra.mxu0 %v54
    %106 = vmatprep.subr.mxu0 0.0
    %107 = vmatpush1.msra.mxu0 %v55
    %108 = vmatprep.subr.mxu0 0.0
    %109 = vmatpush1.msra.mxu0 %v56
    %110 = vmatprep.subr.mxu0 0.0
    %111 = vmatpush1.msra.mxu0 %v57
    %112 = vmatprep.subr.mxu0 0.0
    %113 = vmatpush1.msra.mxu0 %v58
    %114 = vmatprep.subr.mxu0 0.0
    %115 = vmatpush1.msra.mxu0 %v59
    %116 = vmatprep.subr.mxu0 0.0
    %117 = vmatpush1.msra.mxu0 %v60
    %118 = vmatprep.subr.mxu0 0.0
    %119 = vmatpush1.msra.mxu0 %v61
    %120 = vmatprep.subr.mxu0 0.0
    %121 = vmatpush1.msra.mxu0 %v62
    %122 = vmatprep.subr.mxu0 0.0
    %123 = vmatpush1.msra.mxu0 %v63
    %124 = vmatprep.subr.mxu0 0.0
    %125 = vmatpush1.msra.mxu0 %v64
    %126 = vmatprep.subr.mxu0 0.0
    %127 = vmatpush1.msra.mxu0 %v65
    %128 = vmatprep.subr.mxu0 0.0
    %129 = vmatpush1.msra.mxu0 %v66
    %130 = vmatprep.subr.mxu0 0.0
    %131 = vmatpush1.msra.mxu0 %v67
    %132 = vmatprep.mubr.f32.mxu0 %v35
    %133 = vmatmul.mubr.f32.gmra.mrb[0].mxu0 %v34
    %v134 = vpop.f32.mrb[0].mxu0
    %v135 = vadd.f32 0.0, %v134
    %v136 = vpop.f32.mrb[0].mxu0
    %137 = vdwg.mxu0
    %v138 = vadd.f32 %v33, %v135
    %139 = vst [vmem:[#allocation2] sm:$0xff] %v138
    // Predicated region
    $region22: #{arch5_forward.1} parent=1 // pred_check
      %p140 = pneg %p28
    $region23: #{arch5_forward.1} parent=1 // pred_check_branch
      %142 = sbr.rel (%p140) target = $region25
    $region24: #{arch5_forward.1} parent=1 // pred_region
      %v143 = vld [vmem:[#allocation2] sm:$0xff]
      %v144 = vld [vmem:[%s2] sm:$0x1]
      %v146 = vlaneseq
      %v147 = vshrl.u32 %v146, 7
      %v148 = vsub.s32 0, %v147
      %v149 = vrot.slane %v144, %v148
      %v151 = vadd.f32 %v143, %v149
      %v152 = vand.u32 2147483647, %v151
      %153 = vst [vmem:[%s3] sm:$0xff] %v152
    $region25: #{arch5_forward.1} parent=1 // pred_fallthru
      _
    // Predicated region
    $region26: #{arch5_forward.1} parent=1 // pred_check
      _
    $region27: #{arch5_forward.1} parent=1 // pred_check_branch
      %155 = sbr.rel (0) target = $region29
    $region28: #{arch5_forward.1} parent=1 // pred_region
      _
    $region29: #{arch5_forward.1} parent=1 // pred_fallthru
      _
    // Predicated region
    $region30: #{arch5_forward.1} parent=1 // pred_check
      _
    $region31: #{arch5_forward.1} parent=1 // pred_check_branch
      %157 = sbr.rel (0) target = $region33
    $region32: #{arch5_forward.1} parent=1 // pred_region
      _
    $region33: #{arch5_forward.1} parent=1 // pred_fallthru
      _
    %158 = vsyncpa [#allocation4], 1

</llo_original>
